<compile_context>
chip_gen: v5e
topology: v5e:2x2
jax: 0.10.0
libtpu: 0.0.40
codegen_flags: <defaults>
</compile_context>

<pallas_src>
import functools
from functools import reduce
from operator import mul

import jax
import jax.numpy as jnp
from jax.experimental import pallas as pl
from jax.experimental.pallas import tpu as pltpu


def _round_up(x, m):
    return ((x + m - 1) // m) * m


def _choose_tile(dim, cap, align):
    """Aligned full dim if it fits under cap, else the aligned tile <= cap
    that minimizes padded size (preferring larger tiles)."""
    dim_aligned = _round_up(dim, align)
    if dim_aligned <= max(cap, align):
        return dim_aligned
    best_t, best_pad = align, _round_up(dim, align)
    t = 2 * align
    while t <= cap:
        pad = _round_up(dim, t)
        if pad < best_pad or (pad == best_pad and t > best_t):
            best_t, best_pad = t, pad
        t += align
    return best_t


def _cpg_fused_kernel(cache_h, q_ref, *rest):
    """Fused hidden MLP + final projection for one (batch-tile, F-tile) step.

    All weights arrive in (in, out) layout, so every matmul is a canonical
    (m,k)x(k,n) dot; accumulation is always f32.
    """
    if cache_h:
        *hid_refs, w_ref, o_ref, h_ref = rest
    else:
        *hid_refs, w_ref, o_ref = rest
        h_ref = None

    def hidden_mlp():
        h = q_ref[...].astype(jnp.float32)
        for hw in hid_refs:
            h = jnp.dot(h, hw[...].astype(jnp.float32),
                        preferred_element_type=jnp.float32)
            h = jnp.maximum(h, 0.0)      # ReLU (Dropout = identity at eval)
        return h

    if cache_h:
        # h depends only on the batch tile: compute once per batch tile.
        @pl.when(pl.program_id(1) == 0)
        def _():
            h_ref[...] = hidden_mlp()
        h = h_ref[...]
    else:
        # Single batch tile: recompute h per F tile (hidden under the
        # memory-bound out_weight stream); lets both grid axes be "parallel"
        # so the F axis is sharded across v7x's two TensorCores.
        h = hidden_mlp()

    w = w_ref[...]
    o_ref[...] = jnp.dot(h.astype(w.dtype), w,
                         preferred_element_type=jnp.float32).astype(o_ref.dtype)


@functools.partial(jax.jit,
                   static_argnames=("output_shape", "tm", "tn", "weight_dtype"))
def cpg_forward(query_emb, hidden_weights, out_weight, *, output_shape,
                tm=256, tn=2048, weight_dtype=None):
    """ContextualParameterGenerator.forward (inference).

    query_emb      : (B, network_structure[0])
    hidden_weights : tuple of (out_i, in_i) matrices (PyTorch Linear layout)
    out_weight     : (prod(output_shape), last_hidden) (PyTorch Linear layout)
    weight_dtype   : optional dtype for the streamed out_weight (e.g.
                     jnp.bfloat16); MXU accumulation stays f32.
    returns        : (B, *output_shape) float32
    """
    hidden_weights = tuple(hidden_weights)
    B, D0 = query_emb.shape
    F, H = out_weight.shape                      # H == last hidden width

    # One-time layout fix: PyTorch (out, in) -> (in, out).
    hw_t = tuple(w.T for w in hidden_weights)    # tiny, VMEM-resident
    w_t = out_weight.T                           # (H, F), lane-dense tiles
    if weight_dtype is not None:
        w_t = w_t.astype(weight_dtype)

    # ---- tiling & padding: blocks always (8,128)-legal and lane-dense ------
    btm = _choose_tile(B, tm, 8)
    btn = _choose_tile(F, tn, 128)
    B_pad = _round_up(B, btm)
    F_pad = _round_up(F, btn)
    q = query_emb
    if B_pad != B:
        q = jnp.pad(q, ((0, B_pad - B), (0, 0)))
    if F_pad != F:
        w_t = jnp.pad(w_t, ((0, 0), (0, F_pad - F)))
    n_btiles = B_pad // btm
    n_ftiles = F_pad // btn

    cache_h = n_btiles > 1
    semantics = (("parallel", "arbitrary") if cache_h
                 else ("parallel", "parallel"))

    in_specs = [pl.BlockSpec((btm, D0), lambda i, j: (i, 0))]
    in_specs += [pl.BlockSpec(w.shape, lambda i, j: (0, 0)) for w in hw_t]
    in_specs += [pl.BlockSpec((H, btn), lambda i, j: (0, j))]
    out_spec = pl.BlockSpec((btm, btn), lambda i, j: (i, j))
    scratch = [pltpu.VMEM((btm, H), jnp.float32)] if cache_h else []

    hid_flops = 2 * B_pad * sum(int(wi) * int(wo)
                                for (wi, wo) in (w.shape for w in hw_t))
    flops = 2 * B_pad * H * F_pad + hid_flops * (1 if cache_h else n_ftiles)
    bytes_accessed = (B_pad * D0 * query_emb.dtype.itemsize
                      + sum(w.size * w.dtype.itemsize for w in hw_t)
                      + n_btiles * H * F_pad * w_t.dtype.itemsize  # per batch tile
                      + B_pad * F_pad * 4)
    cost = pl.CostEstimate(flops=int(flops), transcendentals=0,
                           bytes_accessed=int(bytes_accessed))

    flat = pl.pallas_call(
        functools.partial(_cpg_fused_kernel, cache_h),
        out_shape=jax.ShapeDtypeStruct((B_pad, F_pad), jnp.float32),
        grid=(n_btiles, n_ftiles),
        in_specs=in_specs,
        out_specs=out_spec,
        scratch_shapes=scratch,
        compiler_params=pltpu.CompilerParams(dimension_semantics=semantics),
        cost_estimate=cost,
    )(q, *hw_t, w_t)

    if B_pad != B or F_pad != F:
        flat = flat[:B, :F]
    return flat.reshape((-1,) + tuple(output_shape))


def cpg_forward_ref(query_emb, hidden_weights, out_weight, output_shape):
    """Pure-JAX reference matching the PyTorch forward (inference mode)."""
    h = query_emb
    for w in hidden_weights:
        h = jax.nn.relu(h @ w.T)
    flat = h @ out_weight.T
    return flat.reshape((-1,) + tuple(output_shape))


def _make_case(key, network_structure, output_shape, batch):
    flat_out = reduce(mul, output_shape, 1)
    n_hidden = len(network_structure) - 1
    ks = jax.random.split(key, n_hidden + 2)
    # nn.Linear weight layout: (out_features, in_features), bias=False.
    hidden_weights = tuple(
        jax.random.normal(
            ks[i], (network_structure[i + 1], network_structure[i]),
            jnp.float32) * 0.1
        for i in range(n_hidden))
    out_weight = jax.random.normal(
        ks[n_hidden], (flat_out, network_structure[-1]), jnp.float32) * 0.1
    query_emb = jax.random.normal(
        ks[n_hidden + 1], (batch, network_structure[0]), jnp.float32)
    return query_emb, hidden_weights, out_weight


if __name__ == "__main__":
    key = jax.random.PRNGKey(0)
    k1, k2 = jax.random.split(key)

    # Case 1: default module config (single batch tile -> recompute-h path;
    # B and F already tile-aligned). network_structure=[32,64,64],
    # output_shape=[8,16], dropout identity, no batch norm, no bias.
    ns1, os1, b1 = [32, 64, 64], (8, 16), 8
    q1, hw1, ow1 = _make_case(k1, ns1, os1, b1)
    out1 = jax.block_until_ready(cpg_forward(q1, hw1, ow1, output_shape=os1))
    ref1 = cpg_forward_ref(q1, hw1, ow1, os1)
    assert out1.shape == (b1,) + os1
    assert jnp.allclose(out1, ref1, atol=1e-5, rtol=1e-5), "case1 mismatch"

    # Case 1b: bf16 out_weight stream, f32 accumulation.
    out1b = jax.block_until_ready(
        cpg_forward(q1, hw1, ow1, output_shape=os1, weight_dtype=jnp.bfloat16))
    assert jnp.allclose(out1b, ref1, atol=2e-2, rtol=2e-2), "case1 bf16 mismatch"

    # Case 2: ragged shapes (B=20 not a tile multiple, F=63 < 128) with tiny
    # tm so the multi-batch-tile (cached-h, arbitrary-F) path and the
    # pad-and-slice plumbing are both exercised.
    ns2, os2, b2 = [24, 40], (7, 9), 20
    q2, hw2, ow2 = _make_case(k2, ns2, os2, b2)
    out2 = jax.block_until_ready(
        cpg_forward(q2, hw2, ow2, output_shape=os2, tm=8))
    ref2 = cpg_forward_ref(q2, hw2, ow2, os2)
    assert out2.shape == (b2,) + os2
    assert jnp.allclose(out2, ref2, atol=1e-5, rtol=1e-5), "case2 mismatch"

    # TODO(synk): training-mode Dropout (stochastic masking) and BatchNorm1d
    # running-stat updates are not implemented; this is the inference forward
    # with use_batch_norm=False, use_bias=False (the module defaults).
    print("KERNEL_OK")
</pallas_src>

<mosaic_0001>
module attributes {stable_mosaic.version = 11 : i64} {
  func.func @_cpg_fused_kernel(%arg0: i32, %arg1: i32, %arg2: memref<8x32xf32, #tpu.memory_space<vmem>>, %arg3: memref<32x64xf32, #tpu.memory_space<vmem>>, %arg4: memref<64x64xf32, #tpu.memory_space<vmem>>, %arg5: memref<64x128xf32, #tpu.memory_space<vmem>>, %arg6: memref<8x128xf32, #tpu.memory_space<vmem>>) attributes {dimension_semantics = [#tpu.dimension_semantics<parallel>, #tpu.dimension_semantics<parallel>], iteration_bounds = array<i64: 1, 1>, scalar_prefetch = 0 : i64, scratch_operands = 0 : i64, tpu.core_type = #tpu.core_type<tc>, window_params = [{transform_indices = @transform_0, window_bounds = array<i64: 8, 32>}, {pipeline_mode = #tpu.pipeline_mode<synchronous>, transform_indices = @transform_1, window_bounds = array<i64: 32, 64>}, {pipeline_mode = #tpu.pipeline_mode<synchronous>, transform_indices = @transform_2, window_bounds = array<i64: 64, 64>}, {transform_indices = @transform_3, window_bounds = array<i64: 64, 128>}, {transform_indices = @transform_4, window_bounds = array<i64: 8, 128>}]} {
    %c0 = arith.constant 0 : index
    %c0_0 = arith.constant 0 : index
    %0 = vector.load %arg2[%c0, %c0_0] : memref<8x32xf32, #tpu.memory_space<vmem>>, vector<8x32xf32>
    %c0_1 = arith.constant 0 : index
    %c0_2 = arith.constant 0 : index
    %1 = vector.load %arg3[%c0_1, %c0_2] : memref<32x64xf32, #tpu.memory_space<vmem>>, vector<32x64xf32>
    %cst = arith.constant dense<0.000000e+00> : vector<8x64xf32>
    %2 = tpu.matmul %0, %1, %cst {dimension_numbers = #tpu.dot_dimension_numbers<[1], [0], [0], [1], [0, 0, 1, 1], [], []>} : vector<8x32xf32>, vector<32x64xf32>, vector<8x64xf32> -> vector<8x64xf32>
    %cst_3 = arith.constant 0.000000e+00 : f32
    %3 = vector.broadcast %cst_3 : f32 to vector<8x64xf32>
    %4 = arith.maximumf %2, %3 : vector<8x64xf32>
    %c0_4 = arith.constant 0 : index
    %c0_5 = arith.constant 0 : index
    %5 = vector.load %arg4[%c0_4, %c0_5] : memref<64x64xf32, #tpu.memory_space<vmem>>, vector<64x64xf32>
    %cst_6 = arith.constant dense<0.000000e+00> : vector<8x64xf32>
    %6 = tpu.matmul %4, %5, %cst_6 {dimension_numbers = #tpu.dot_dimension_numbers<[1], [0], [0], [1], [0, 0, 1, 1], [], []>} : vector<8x64xf32>, vector<64x64xf32>, vector<8x64xf32> -> vector<8x64xf32>
    %cst_7 = arith.constant 0.000000e+00 : f32
    %7 = vector.broadcast %cst_7 : f32 to vector<8x64xf32>
    %8 = arith.maximumf %6, %7 : vector<8x64xf32>
    %c0_8 = arith.constant 0 : index
    %c0_9 = arith.constant 0 : index
    %9 = vector.load %arg5[%c0_8, %c0_9] : memref<64x128xf32, #tpu.memory_space<vmem>>, vector<64x128xf32>
    %cst_10 = arith.constant dense<0.000000e+00> : vector<8x128xf32>
    %10 = tpu.matmul %8, %9, %cst_10 {dimension_numbers = #tpu.dot_dimension_numbers<[1], [0], [0], [1], [0, 0, 1, 1], [], []>} : vector<8x64xf32>, vector<64x128xf32>, vector<8x128xf32> -> vector<8x128xf32>
    %c0_11 = arith.constant 0 : index
    %c0_12 = arith.constant 0 : index
    %11 = vector.load %arg6[%c0_11, %c0_12] : memref<8x128xf32, #tpu.memory_space<vmem>>, vector<8x128xf32>
    tpu.vector_store %arg6[%c0_11, %c0_12], %10 {strides = array<i32>} : memref<8x128xf32, #tpu.memory_space<vmem>>, vector<8x128xf32>,
    return
  }
  func.func @transform_0(%arg0: i32, %arg1: i32) -> (i32, i32) {
    %c0_i32 = arith.constant 0 : i32
    %c0_i32_0 = arith.constant 0 : i32
    return %arg0, %c0_i32 : i32, i32
  }
  func.func @transform_1(%arg0: i32, %arg1: i32) -> (i32, i32) {
    %c0_i32 = arith.constant 0 : i32
    %c0_i32_0 = arith.constant 0 : i32
    %c0_i32_1 = arith.constant 0 : i32
    return %c0_i32, %c0_i32_0 : i32, i32
  }
  func.func @transform_2(%arg0: i32, %arg1: i32) -> (i32, i32) {
    %c0_i32 = arith.constant 0 : i32
    %c0_i32_0 = arith.constant 0 : i32
    %c0_i32_1 = arith.constant 0 : i32
    return %c0_i32, %c0_i32_0 : i32, i32
  }
  func.func @transform_3(%arg0: i32, %arg1: i32) -> (i32, i32) {
    %c0_i32 = arith.constant 0 : i32
    %c0_i32_0 = arith.constant 0 : i32
    return %c0_i32, %arg1 : i32, i32
  }
  func.func @transform_4(%arg0: i32, %arg1: i32) -> (i32, i32) {
    %c0_i32 = arith.constant 0 : i32
    return %arg0, %arg1 : i32, i32
  }
}

</mosaic_0001>

<llo_original>
// kernel: cpg_forward.1
$region0: #{cpg_forward.1}
  #allocation0 [shape = 'u32[]', space=smem, size = 0x4, offset = 0x4, fixed_abs, tag = 'smem constant byte address 0x4 - core index']
  #allocation1 [shape = 'u32[72,128]{1,0:T(1,128)}', space=vmem, size = 0x9000, scoped, tag = 'internal scratch']
  %s0 = inlined_call_operand.vmem [shape: f32[8,32], index: 0, kind: input, shape index: {}]
  %s1 = inlined_call_operand.vmem [shape: f32[32,64], index: 1, kind: input, shape index: {}]
  %s2 = inlined_call_operand.vmem [shape: f32[64,64], index: 2, kind: input, shape index: {}]
  %s3 = inlined_call_operand.vmem [shape: f32[64,128], index: 3, kind: input, shape index: {}]
  %s4 = inlined_call_operand.vmem [shape: f32[8,128], index: 4, kind: output, shape index: {}]
  %s5 = sld [smem:[#allocation0]]
  $region26: #{cpg_forward.1} parent=0
    _
  %s7 = ssub.s32 1, %s5
  %s8 = scalar_select 0, %s7, %s5
  // Predicated region
  $region2: #{cpg_forward.1} parent=0 // pred_check
    _
  $region3: #{cpg_forward.1} parent=0 // pred_check_branch
    %10 = sbr.rel (0) target = $region5
  $region4: #{cpg_forward.1} parent=0 // pred_region
    _
  $region5: #{cpg_forward.1} parent=0 // pred_fallthru
    _
  // Predicated region
  $region6: #{cpg_forward.1} parent=0 // pred_check
    _
  $region7: #{cpg_forward.1} parent=0 // pred_check_branch
    %12 = sbr.rel (0) target = $region9
  $region8: #{cpg_forward.1} parent=0 // pred_region
    _
  $region9: #{cpg_forward.1} parent=0 // pred_fallthru
    _
  // Predicated region
  $region10: #{cpg_forward.1} parent=0 // pred_check
    _
  $region11: #{cpg_forward.1} parent=0 // pred_check_branch
    %14 = sbr.rel (0) target = $region13
  $region12: #{cpg_forward.1} parent=0 // pred_region
    _
  $region13: #{cpg_forward.1} parent=0 // pred_fallthru
    _
  // Predicated region
  $region14: #{cpg_forward.1} parent=0 // pred_check
    _
  $region15: #{cpg_forward.1} parent=0 // pred_check_branch
    %16 = sbr.rel (0) target = $region17
  $region16: #{cpg_forward.1} parent=0 // pred_region
    _
  $region17: #{cpg_forward.1} parent=0 // pred_fallthru
    _
  %v17 = vld [vmem:[%s0] sm:$0xff]
  %v18 = vld [vmem:[%s1] sm:$0xff]
  %v19 = vld [vmem:[%s1 + $0x8] sm:$0xff]
  %v20 = vld [vmem:[%s1 + $0x10] sm:$0xff]
  %v21 = vld [vmem:[%s1 + $0x18] sm:$0xff]
  %vm22 = vcmask 261120
  %v24 = vsel %vm22, %v17, 0
  %26 = vmatpush.msra.mxu0 0.0
  %27 = vmatpush.msra.mxu0 0.0
  %28 = vmatpush.msra.mxu0 0.0
  %29 = vmatpush.msra.mxu0 0.0
  %30 = vmatpush.msra.mxu0 0.0
  %31 = vmatpush.msra.mxu0 0.0
  %32 = vmatpush.msra.mxu0 0.0
  %33 = vmatpush.msra.mxu0 0.0
  %34 = vmatpush.msra.mxu0 0.0
  %35 = vmatpush.msra.mxu0 0.0
  %36 = vmatpush.msra.mxu0 0.0
  %37 = vmatpush.msra.mxu0 0.0
  %38 = vmatpush.msra.mxu0 %v21
  %39 = vmatpush.msra.mxu0 %v20
  %40 = vmatpush.msra.mxu0 %v19
  %41 = vmatpush.msra.mxu0 %v18
  %42 = vmatmul.f32.gmra.mxu0 %v24
  %v43 = vpop.f32.mrf.mxu0
  %v44 = vadd.f32 0.0, %v43
  %45 = vdwg.mxu0
  %v46 = vmax.f32 %v44, 0.0
  %v47 = vld [vmem:[%s2] sm:$0xff]
  %v48 = vld [vmem:[%s2 + $0x8] sm:$0xff]
  %v49 = vld [vmem:[%s2 + $0x10] sm:$0xff]
  %v50 = vld [vmem:[%s2 + $0x18] sm:$0xff]
  %v51 = vld [vmem:[%s2 + $0x20] sm:$0xff]
  %v52 = vld [vmem:[%s2 + $0x28] sm:$0xff]
  %v53 = vld [vmem:[%s2 + $0x30] sm:$0xff]
  %v54 = vld [vmem:[%s2 + $0x38] sm:$0xff]
  %vm55 = vcmask 523264
  %v57 = vsel %vm55, %v46, 0
  %59 = vmatpush.msra.mxu0 0.0
  %60 = vmatpush.msra.mxu0 0.0
  %61 = vmatpush.msra.mxu0 0.0
  %62 = vmatpush.msra.mxu0 0.0
  %63 = vmatpush.msra.mxu0 0.0
  %64 = vmatpush.msra.mxu0 0.0
  %65 = vmatpush.msra.mxu0 0.0
  %66 = vmatpush.msra.mxu0 0.0
  %67 = vmatpush.msra.mxu0 %v54
  %68 = vmatpush.msra.mxu0 %v53
  %69 = vmatpush.msra.mxu0 %v52
  %70 = vmatpush.msra.mxu0 %v51
  %71 = vmatpush.msra.mxu0 %v50
  %72 = vmatpush.msra.mxu0 %v49
  %73 = vmatpush.msra.mxu0 %v48
  %74 = vmatpush.msra.mxu0 %v47
  %75 = vmatmul.f32.gmra.mxu0 %v57
  %v76 = vpop.f32.mrf.mxu0
  %v77 = vadd.f32 0.0, %v76
  %78 = vdwg.mxu0
  %v79 = vmax.f32 %v77, 0.0
  %v80 = vld [vmem:[%s3] sm:$0xff]
  %v81 = vld [vmem:[%s3 + $0x8] sm:$0xff]
  %v82 = vld [vmem:[%s3 + $0x10] sm:$0xff]
  %v83 = vld [vmem:[%s3 + $0x18] sm:$0xff]
  %v84 = vld [vmem:[%s3 + $0x20] sm:$0xff]
  %v85 = vld [vmem:[%s3 + $0x28] sm:$0xff]
  %v86 = vld [vmem:[%s3 + $0x30] sm:$0xff]
  %v87 = vld [vmem:[%s3 + $0x38] sm:$0xff]
  %v89 = vsel %vm55, %v79, 0
  %91 = vmatpush.msra.mxu0 0.0
  %92 = vmatpush.msra.mxu0 0.0
  %93 = vmatpush.msra.mxu0 0.0
  %94 = vmatpush.msra.mxu0 0.0
  %95 = vmatpush.msra.mxu0 0.0
  %96 = vmatpush.msra.mxu0 0.0
  %97 = vmatpush.msra.mxu0 0.0
  %98 = vmatpush.msra.mxu0 0.0
  %99 = vmatpush.msra.mxu0 %v87
  %100 = vmatpush.msra.mxu0 %v86
  %101 = vmatpush.msra.mxu0 %v85
  %102 = vmatpush.msra.mxu0 %v84
  %103 = vmatpush.msra.mxu0 %v83
  %104 = vmatpush.msra.mxu0 %v82
  %105 = vmatpush.msra.mxu0 %v81
  %106 = vmatpush.msra.mxu0 %v80
  %107 = vmatmul.f32.gmra.mxu0 %v89
  %v108 = vpop.f32.mrf.mxu0
  %v109 = vadd.f32 0.0, %v108
  %110 = vdwg.mxu0
  %111 = vst [vmem:[%s4] sm:$0xff] %v109
  // Predicated region
  $region18: #{cpg_forward.1} parent=0 // pred_check
    _
  $region19: #{cpg_forward.1} parent=0 // pred_check_branch
    %113 = sbr.rel (0) target = $region21
  $region20: #{cpg_forward.1} parent=0 // pred_region
    _
  $region21: #{cpg_forward.1} parent=0 // pred_fallthru
    _
  // Predicated region
  $region22: #{cpg_forward.1} parent=0 // pred_check
    _
  $region23: #{cpg_forward.1} parent=0 // pred_check_branch
    %115 = sbr.rel (0) target = $region25
  $region24: #{cpg_forward.1} parent=0 // pred_region
    _
  $region25: #{cpg_forward.1} parent=0 // pred_fallthru
    _

</llo_original>
